<compile_context>
chip_gen: v5e
topology: v5e:2x2
jax: 0.10.0
libtpu: 0.0.40
codegen_flags: <defaults>
</compile_context>

<pallas_src>
import functools
import math

import jax
import jax.numpy as jnp
import numpy as np
from jax import lax
from jax.experimental import pallas as pl
from jax.experimental.pallas import tpu as pltpu


def _mha_kernel(x_ref, w_ref, o_ref, *, n_head, head_size, scale, matmul_dtype):
    # x_ref : (B, T, C)        whole batch, VMEM resident
    # w_ref : (C, 3*H*Hs)      stacked [Wq | Wk | Wv] for all heads, VMEM resident
    # o_ref : (B, T, H*Hs)     concatenated head outputs
    B, T, C = x_ref.shape
    H, Hs = n_head, head_size
    hh = H * Hs
    N = B * H

    # ---- Fused QKV projection: one (B*T, C) x (C, 3*H*Hs) MXU push. ----
    x2 = x_ref[...].reshape(B * T, C)
    qkv = jnp.dot(x2.astype(matmul_dtype), w_ref[...].astype(matmul_dtype),
                  preferred_element_type=jnp.float32)            # (B*T, 3*H*Hs) f32

    # Fold the 1/sqrt(C) scale into q once (B*T*H*Hs elements, not H*B*T*T).
    q_all = qkv[:, 0:hh] * scale
    k_all = qkv[:, hh:2 * hh]
    v_all = qkv[:, 2 * hh:3 * hh]

    # ---- Rearrange lane-concatenated heads into one leading batch dim. ----
    # (B*T, H*Hs) -> (B*H, T, Hs): static lane slices + stack along a new leading
    # axis + leading-dim reshapes only (layout-safe; no sublane<->lane transpose).
    def head_batched(a):
        return jnp.stack(
            [a[:, h * Hs:(h + 1) * Hs].reshape(B, T, Hs) for h in range(H)],
            axis=0).reshape(N, T, Hs)                            # n = h*B + b

    q = head_batched(q_all)
    k = head_batched(k_all)
    v = head_batched(v_all)

    # ---- Head-batched attention: one score matmul, one softmax, one PV matmul. ----
    s = jnp.einsum('nqd,nkd->nqk', q.astype(matmul_dtype), k.astype(matmul_dtype),
                   preferred_element_type=jnp.float32)           # (N, T, T)

    # Causal (tril) mask. The diagonal is always unmasked, so -inf is NaN-safe here.
    row = lax.broadcasted_iota(jnp.int32, (N, T, T), 1)
    col = lax.broadcasted_iota(jnp.int32, (N, T, T), 2)
    s = jnp.where(row >= col, s, -jnp.inf)

    # Numerically-stable softmax; all VPU/EUP math stays in f32 (v5e-safe).
    m = jnp.max(s, axis=-1, keepdims=True)
    p = jnp.exp(s - m)
    denom = jnp.sum(p, axis=-1, keepdims=True)
    # TODO(synk): switch to approx=True (EUP vrcp) when T grows / tolerance is relaxed.
    inv = pl.reciprocal(denom, approx=False)                     # (N, T, 1)

    # Normalize after the PV matmul: scales (N, T, Hs) by a (N, T, 1) broadcast.
    o_n = jnp.einsum('nqk,nkd->nqd', p.astype(matmul_dtype), v.astype(matmul_dtype),
                     preferred_element_type=jnp.float32) * inv   # (N, T, Hs)

    # ---- Back to (B, T, H*Hs): leading-dim split + lane concat (head order kept). ----
    o4 = o_n.reshape(H, B, T, Hs)
    o = jnp.concatenate([o4[h] for h in range(H)], axis=-1)      # (B, T, H*Hs)
    # TODO(synk): a (B, T*H*Hs) lane-dense store (>=128-lane rows) would replace the
    # masked vst on this 32-lane minor dim; skipped at this tiny size (negligible win)
    # to avoid an in-kernel sublane->lane flatten.
    o_ref[...] = o.astype(o_ref.dtype)


def multi_head_attention(x, wq, wk, wv, *, matmul_dtype=jnp.float32):
    """x: (B, T, C); wq/wk/wv: (H, C, Hs). Returns (B, T, H*Hs).

    Equivalent to torch.cat([Head_h(x) for h in range(H)], dim=-1) with
    scale = 1/sqrt(n_embed) (matching the PyTorch module, not 1/sqrt(head_size)).
    `matmul_dtype=jnp.bfloat16` runs the three MXU matmuls with bf16 operands
    (f32 accumulation); softmax stays in f32.
    """
    B, T, C = x.shape
    H, _, Hs = wq.shape
    scale = 1.0 / math.sqrt(C)   # matches the PyTorch module: 1/sqrt(n_embed)

    # Stack per-head weights into one lane-dense (C, 3*H*Hs) matrix:
    # columns [ q_h0 .. q_h{H-1} | k_h0 .. | v_h0 .. ].
    def stack(w):  # (H, C, Hs) -> (C, H*Hs)
        return jnp.transpose(w, (1, 0, 2)).reshape(C, H * Hs)

    w_all = jnp.concatenate([stack(wq), stack(wk), stack(wv)], axis=-1)  # (C, 3*H*Hs)

    kernel = functools.partial(_mha_kernel, n_head=H, head_size=Hs,
                               scale=scale, matmul_dtype=matmul_dtype)

    # Single grid step: the whole problem fits easily in VMEM on v5e/v6e/v7x, so B is
    # folded into the block (one ~0.35us pipeline step total instead of one per batch
    # element) and the constant weight block needs no per-step DMA / double-buffering.
    # TODO(synk): for large T, block the query dim and switch to a KV-blocked
    # online-softmax loop with tiles sized against v7x's 64 MiB VMEM (not 128 MiB).
    return pl.pallas_call(
        kernel,
        out_shape=jax.ShapeDtypeStruct((B, T, H * Hs), x.dtype),
        grid=(1,),
        in_specs=[
            pl.BlockSpec((B, T, C), lambda i: (0, 0, 0)),
            pl.BlockSpec((C, 3 * H * Hs), lambda i: (0, 0)),
        ],
        out_specs=pl.BlockSpec((B, T, H * Hs), lambda i: (0, 0, 0)),
        compiler_params=pltpu.CompilerParams(
            dimension_semantics=("arbitrary",)),
    )(x, w_all)


def _reference(x, wq, wk, wv):
    """Plain-JAX reference mirroring the PyTorch Head.forward per head, concatenated."""
    B, T, C = x.shape
    H, _, Hs = wq.shape
    scale = 1.0 / math.sqrt(C)
    tril = jnp.tril(jnp.ones((T, T), dtype=bool))
    outs = []
    for h in range(H):
        q = x @ wq[h]
        k = x @ wk[h]
        v = x @ wv[h]
        s = (q @ jnp.swapaxes(k, -1, -2)) * scale
        s = jnp.where(tril, s, -jnp.inf)
        p = jax.nn.softmax(s, axis=-1)
        outs.append(p @ v)
    return jnp.concatenate(outs, axis=-1)


if __name__ == "__main__":
    # Small hyperparameters consistent with the module.
    n_head = 4
    n_embed = 32
    context_length = 8
    head_size = n_embed // n_head   # 8

    B, T = 2, context_length

    key = jax.random.PRNGKey(0)
    kx, kq, kk, kv = jax.random.split(key, 4)

    bound = 1.0 / math.sqrt(n_embed)
    x = jax.random.normal(kx, (B, T, n_embed), dtype=jnp.float32)
    wq = jax.random.uniform(kq, (n_head, n_embed, head_size), jnp.float32, -bound, bound)
    wk = jax.random.uniform(kk, (n_head, n_embed, head_size), jnp.float32, -bound, bound)
    wv = jax.random.uniform(kv, (n_head, n_embed, head_size), jnp.float32, -bound, bound)

    ref = _reference(x, wq, wk, wv)

    # Exact-precision path (f32 MXU operands): matches the PyTorch module numerics.
    out = jax.block_until_ready(multi_head_attention(x, wq, wk, wv))
    np.testing.assert_allclose(np.asarray(out), np.asarray(ref), rtol=1e-5, atol=1e-5)
    assert out.shape == (B, T, n_embed)

    # Fast path (bf16 MXU operands, f32 accumulation + f32 softmax): relaxed tolerance.
    out_bf16 = jax.block_until_ready(
        multi_head_attention(x, wq, wk, wv, matmul_dtype=jnp.bfloat16))
    np.testing.assert_allclose(np.asarray(out_bf16), np.asarray(ref), rtol=3e-2, atol=3e-2)

    print("KERNEL_OK")
</pallas_src>

<mosaic_0001>
module attributes {stable_mosaic.version = 11 : i64} {
  func.func @_mha_kernel(%arg0: i32, %arg1: memref<2x8x32xf32, #tpu.memory_space<vmem>>, %arg2: memref<32x96xf32, #tpu.memory_space<vmem>>, %arg3: memref<2x8x32xf32, #tpu.memory_space<vmem>>) attributes {dimension_semantics = [#tpu.dimension_semantics<arbitrary>], iteration_bounds = array<i64: 1>, scalar_prefetch = 0 : i64, scratch_operands = 0 : i64, tpu.core_type = #tpu.core_type<tc>, window_params = [{pipeline_mode = #tpu.pipeline_mode<synchronous>, transform_indices = @transform_0, window_bounds = array<i64: 2, 8, 32>}, {pipeline_mode = #tpu.pipeline_mode<synchronous>, transform_indices = @transform_1, window_bounds = array<i64: 32, 96>}, {pipeline_mode = #tpu.pipeline_mode<synchronous>, transform_indices = @transform_2, window_bounds = array<i64: 2, 8, 32>}]} {
    %c0 = arith.constant 0 : index
    %c0_0 = arith.constant 0 : index
    %c0_1 = arith.constant 0 : index
    %0 = vector.load %arg1[%c0, %c0_0, %c0_1] : memref<2x8x32xf32, #tpu.memory_space<vmem>>, vector<2x8x32xf32>
    %1 = vector.shape_cast %0 : vector<2x8x32xf32> to vector<16x32xf32>
    %c0_2 = arith.constant 0 : index
    %c0_3 = arith.constant 0 : index
    %2 = vector.load %arg2[%c0_2, %c0_3] : memref<32x96xf32, #tpu.memory_space<vmem>>, vector<32x96xf32>
    %cst = arith.constant dense<0.000000e+00> : vector<16x96xf32>
    %3 = tpu.matmul %1, %2, %cst {dimension_numbers = #tpu.dot_dimension_numbers<[1], [0], [0], [1], [0, 0, 1, 1], [], []>} : vector<16x32xf32>, vector<32x96xf32>, vector<16x96xf32> -> vector<16x96xf32>
    %4 = vector.extract_strided_slice %3 {offsets = [0, 0], sizes = [16, 32], strides = [1, 1]} : vector<16x96xf32> to vector<16x32xf32>
    %cst_4 = arith.constant 0.176776692 : f32
    %5 = vector.broadcast %cst_4 : f32 to vector<16x32xf32>
    %6 = arith.mulf %4, %5 : vector<16x32xf32>
    %7 = vector.extract_strided_slice %3 {offsets = [0, 32], sizes = [16, 32], strides = [1, 1]} : vector<16x96xf32> to vector<16x32xf32>
    %8 = vector.extract_strided_slice %3 {offsets = [0, 64], sizes = [16, 32], strides = [1, 1]} : vector<16x96xf32> to vector<16x32xf32>
    %9 = vector.extract_strided_slice %6 {offsets = [0, 0], sizes = [16, 8], strides = [1, 1]} : vector<16x32xf32> to vector<16x8xf32>
    %10 = vector.shape_cast %9 : vector<16x8xf32> to vector<2x8x8xf32>
    %11 = vector.extract_strided_slice %6 {offsets = [0, 8], sizes = [16, 8], strides = [1, 1]} : vector<16x32xf32> to vector<16x8xf32>
    %12 = vector.shape_cast %11 : vector<16x8xf32> to vector<2x8x8xf32>
    %13 = vector.extract_strided_slice %6 {offsets = [0, 16], sizes = [16, 8], strides = [1, 1]} : vector<16x32xf32> to vector<16x8xf32>
    %14 = vector.shape_cast %13 : vector<16x8xf32> to vector<2x8x8xf32>
    %15 = vector.extract_strided_slice %6 {offsets = [0, 24], sizes = [16, 8], strides = [1, 1]} : vector<16x32xf32> to vector<16x8xf32>
    %16 = vector.shape_cast %15 : vector<16x8xf32> to vector<2x8x8xf32>
    %17 = vector.shape_cast %10 : vector<2x8x8xf32> to vector<1x2x8x8xf32>
    %18 = vector.shape_cast %12 : vector<2x8x8xf32> to vector<1x2x8x8xf32>
    %19 = vector.shape_cast %14 : vector<2x8x8xf32> to vector<1x2x8x8xf32>
    %20 = vector.shape_cast %16 : vector<2x8x8xf32> to vector<1x2x8x8xf32>
    %21 = tpu.concatenate %17, %18, %19, %20 in 0 : vector<1x2x8x8xf32>, vector<1x2x8x8xf32>, vector<1x2x8x8xf32>, vector<1x2x8x8xf32> -> vector<4x2x8x8xf32>
    %22 = vector.shape_cast %21 : vector<4x2x8x8xf32> to vector<8x8x8xf32>
    %23 = vector.extract_strided_slice %7 {offsets = [0, 0], sizes = [16, 8], strides = [1, 1]} : vector<16x32xf32> to vector<16x8xf32>
    %24 = vector.shape_cast %23 : vector<16x8xf32> to vector<2x8x8xf32>
    %25 = vector.extract_strided_slice %7 {offsets = [0, 8], sizes = [16, 8], strides = [1, 1]} : vector<16x32xf32> to vector<16x8xf32>
    %26 = vector.shape_cast %25 : vector<16x8xf32> to vector<2x8x8xf32>
    %27 = vector.extract_strided_slice %7 {offsets = [0, 16], sizes = [16, 8], strides = [1, 1]} : vector<16x32xf32> to vector<16x8xf32>
    %28 = vector.shape_cast %27 : vector<16x8xf32> to vector<2x8x8xf32>
    %29 = vector.extract_strided_slice %7 {offsets = [0, 24], sizes = [16, 8], strides = [1, 1]} : vector<16x32xf32> to vector<16x8xf32>
    %30 = vector.shape_cast %29 : vector<16x8xf32> to vector<2x8x8xf32>
    %31 = vector.shape_cast %24 : vector<2x8x8xf32> to vector<1x2x8x8xf32>
    %32 = vector.shape_cast %26 : vector<2x8x8xf32> to vector<1x2x8x8xf32>
    %33 = vector.shape_cast %28 : vector<2x8x8xf32> to vector<1x2x8x8xf32>
    %34 = vector.shape_cast %30 : vector<2x8x8xf32> to vector<1x2x8x8xf32>
    %35 = tpu.concatenate %31, %32, %33, %34 in 0 : vector<1x2x8x8xf32>, vector<1x2x8x8xf32>, vector<1x2x8x8xf32>, vector<1x2x8x8xf32> -> vector<4x2x8x8xf32>
    %36 = vector.shape_cast %35 : vector<4x2x8x8xf32> to vector<8x8x8xf32>
    %37 = vector.extract_strided_slice %8 {offsets = [0, 0], sizes = [16, 8], strides = [1, 1]} : vector<16x32xf32> to vector<16x8xf32>
    %38 = vector.shape_cast %37 : vector<16x8xf32> to vector<2x8x8xf32>
    %39 = vector.extract_strided_slice %8 {offsets = [0, 8], sizes = [16, 8], strides = [1, 1]} : vector<16x32xf32> to vector<16x8xf32>
    %40 = vector.shape_cast %39 : vector<16x8xf32> to vector<2x8x8xf32>
    %41 = vector.extract_strided_slice %8 {offsets = [0, 16], sizes = [16, 8], strides = [1, 1]} : vector<16x32xf32> to vector<16x8xf32>
    %42 = vector.shape_cast %41 : vector<16x8xf32> to vector<2x8x8xf32>
    %43 = vector.extract_strided_slice %8 {offsets = [0, 24], sizes = [16, 8], strides = [1, 1]} : vector<16x32xf32> to vector<16x8xf32>
    %44 = vector.shape_cast %43 : vector<16x8xf32> to vector<2x8x8xf32>
    %45 = vector.shape_cast %38 : vector<2x8x8xf32> to vector<1x2x8x8xf32>
    %46 = vector.shape_cast %40 : vector<2x8x8xf32> to vector<1x2x8x8xf32>
    %47 = vector.shape_cast %42 : vector<2x8x8xf32> to vector<1x2x8x8xf32>
    %48 = vector.shape_cast %44 : vector<2x8x8xf32> to vector<1x2x8x8xf32>
    %49 = tpu.concatenate %45, %46, %47, %48 in 0 : vector<1x2x8x8xf32>, vector<1x2x8x8xf32>, vector<1x2x8x8xf32>, vector<1x2x8x8xf32> -> vector<4x2x8x8xf32>
    %50 = vector.shape_cast %49 : vector<4x2x8x8xf32> to vector<8x8x8xf32>
    "tpu.trace_start"() <{level = 10 : i32, message = "nqd,nkd->nqk"}> : () -> ()
    %cst_5 = arith.constant dense<0.000000e+00> : vector<8x8x8xf32>
    %51 = tpu.matmul %22, %36, %cst_5 {dimension_numbers = #tpu.dot_dimension_numbers<[2], [2], [1], [1], [0, 0, 0, 1, 1, 1], [0], [0]>} : vector<8x8x8xf32>, vector<8x8x8xf32>, vector<8x8x8xf32> -> vector<8x8x8xf32>
    "tpu.trace_stop"() : () -> ()
    %52 = tpu.iota {dimensions = array<i32: 1>} : vector<8x8x8xi32>
    %53 = tpu.iota {dimensions = array<i32: 2>} : vector<8x8x8xi32>
    %54 = arith.cmpi sge, %52, %53 : vector<8x8x8xi32>
    %cst_6 = arith.constant 0xFF800000 : f32
    %55 = vector.broadcast %cst_6 : f32 to vector<8x8x8xf32>
    %56 = arith.select %54, %51, %55 : vector<8x8x8xi1>, vector<8x8x8xf32>
    %cst_7 = arith.constant dense<0xFF800000> : vector<8x8xf32>
    %57 = vector.multi_reduction <maximumf>, %56, %cst_7 [2] : vector<8x8x8xf32> to vector<8x8xf32>
    %58 = vector.shape_cast %57 : vector<8x8xf32> to vector<8x8x1xf32>
    %59 = vector.broadcast %58 : vector<8x8x1xf32> to vector<8x8x8xf32>
    %60 = arith.subf %56, %59 : vector<8x8x8xf32>
    %61 = math.exp %60 : vector<8x8x8xf32>
    %cst_8 = arith.constant dense<0.000000e+00> : vector<8x8xf32>
    %62 = vector.multi_reduction <add>, %61, %cst_8 [2] : vector<8x8x8xf32> to vector<8x8xf32>
    %63 = vector.shape_cast %62 : vector<8x8xf32> to vector<8x8x1xf32>
    %64 = tpu.reciprocal %63 : vector<8x8x1xf32> -> vector<8x8x1xf32>
    "tpu.trace_start"() <{level = 10 : i32, message = "nqk,nkd->nqd"}> : () -> ()
    %cst_9 = arith.constant dense<0.000000e+00> : vector<8x8x8xf32>
    %65 = tpu.matmul %61, %50, %cst_9 {dimension_numbers = #tpu.dot_dimension_numbers<[2], [1], [1], [2], [0, 0, 0, 1, 1, 2], [0], [0]>} : vector<8x8x8xf32>, vector<8x8x8xf32>, vector<8x8x8xf32> -> vector<8x8x8xf32>
    "tpu.trace_stop"() : () -> ()
    %66 = vector.broadcast %64 : vector<8x8x1xf32> to vector<8x8x8xf32>
    %67 = arith.mulf %65, %66 : vector<8x8x8xf32>
    %68 = vector.shape_cast %67 : vector<8x8x8xf32> to vector<4x2x8x8xf32>
    %69 = vector.extract_strided_slice %68 {offsets = [0, 0, 0, 0], sizes = [1, 2, 8, 8], strides = [1, 1, 1, 1]} : vector<4x2x8x8xf32> to vector<1x2x8x8xf32>
    %70 = vector.shape_cast %69 : vector<1x2x8x8xf32> to vector<2x8x8xf32>
    %71 = vector.extract_strided_slice %68 {offsets = [1, 0, 0, 0], sizes = [1, 2, 8, 8], strides = [1, 1, 1, 1]} : vector<4x2x8x8xf32> to vector<1x2x8x8xf32>
    %72 = vector.shape_cast %71 : vector<1x2x8x8xf32> to vector<2x8x8xf32>
    %73 = vector.extract_strided_slice %68 {offsets = [2, 0, 0, 0], sizes = [1, 2, 8, 8], strides = [1, 1, 1, 1]} : vector<4x2x8x8xf32> to vector<1x2x8x8xf32>
    %74 = vector.shape_cast %73 : vector<1x2x8x8xf32> to vector<2x8x8xf32>
    %75 = vector.extract_strided_slice %68 {offsets = [3, 0, 0, 0], sizes = [1, 2, 8, 8], strides = [1, 1, 1, 1]} : vector<4x2x8x8xf32> to vector<1x2x8x8xf32>
    %76 = vector.shape_cast %75 : vector<1x2x8x8xf32> to vector<2x8x8xf32>
    %77 = tpu.concatenate %70, %72, %74, %76 in 2 : vector<2x8x8xf32>, vector<2x8x8xf32>, vector<2x8x8xf32>, vector<2x8x8xf32> -> vector<2x8x32xf32>
    %c0_10 = arith.constant 0 : index
    %c0_11 = arith.constant 0 : index
    %c0_12 = arith.constant 0 : index
    %78 = vector.load %arg3[%c0_10, %c0_11, %c0_12] : memref<2x8x32xf32, #tpu.memory_space<vmem>>, vector<2x8x32xf32>
    tpu.vector_store %arg3[%c0_10, %c0_11, %c0_12], %77 {strides = array<i32>} : memref<2x8x32xf32, #tpu.memory_space<vmem>>, vector<2x8x32xf32>,
    return
  }
  func.func @transform_0(%arg0: i32) -> (i32, i32, i32) {
    %c0_i32 = arith.constant 0 : i32
    %c0_i32_0 = arith.constant 0 : i32
    %c0_i32_1 = arith.constant 0 : i32
    %c0_i32_2 = arith.constant 0 : i32
    return %c0_i32, %c0_i32_0, %c0_i32_1 : i32, i32, i32
  }
  func.func @transform_1(%arg0: i32) -> (i32, i32) {
    %c0_i32 = arith.constant 0 : i32
    %c0_i32_0 = arith.constant 0 : i32
    %c0_i32_1 = arith.constant 0 : i32
    return %c0_i32, %c0_i32_0 : i32, i32
  }
  func.func @transform_2(%arg0: i32) -> (i32, i32, i32) {
    %c0_i32 = arith.constant 0 : i32
    %c0_i32_0 = arith.constant 0 : i32
    %c0_i32_1 = arith.constant 0 : i32
    %c0_i32_2 = arith.constant 0 : i32
    return %c0_i32, %c0_i32_0, %c0_i32_1 : i32, i32, i32
  }
}

</mosaic_0001>

<llo_original>
// kernel: tpu_custom_call.1
$region0: #{tpu_custom_call.1}
  #allocation0 [shape = 'u32[]', space=smem, size = 0x4, offset = 0x4, fixed_abs, tag = 'smem constant byte address 0x4 - core index']
  #allocation1 [shape = 'u32[72,128]{1,0:T(1,128)}', space=vmem, size = 0x9000, scoped, tag = 'internal scratch']
  %s0 = inlined_call_operand.hbm [shape: f32[2,8,32], index: 0, kind: input, shape index: {}]
  %s1 = inlined_call_operand.hbm [shape: f32[32,96], index: 1, kind: input, shape index: {}]
  %s2 = inlined_call_operand.hbm [shape: f32[2,8,32], index: 2, kind: output, shape index: {}]
  %s3 = sld [smem:[#allocation0]]
  $region26: #{tpu_custom_call.1} parent=0
    _
  %s5 = ssub.s32 1, %s3
  %s6 = scalar_select 0, %s5, %s3
  $region1: #{tpu_custom_call.1} parent=0
    #allocation2 [shape = 'u8[8192]{0}', space=vmem, size = 0x2000, scoped, tag = 'input window, operand 0, single buffered']
    #allocation3 [shape = 's32[1]{0}', space=sflag, size = 0x4, scoped, tag = 'scoped memory for tpu_custom_call.1']
    #allocation4 [shape = 's32[1]{0}', space=sflag, size = 0x4, scoped, tag = 'scoped memory for tpu_custom_call.1']
    #allocation5 [shape = 'u8[16384]{0}', space=vmem, size = 0x4000, scoped, tag = 'input window, operand 1, single buffered']
    #allocation6 [shape = 's32[1]{0}', space=sflag, size = 0x4, scoped, tag = 'scoped memory for tpu_custom_call.1']
    #allocation7 [shape = 'u8[8192]{0}', space=vmem, size = 0x2000, scoped, tag = 'output window, operand 0, single buffered']
    %7 = vsyncpa [#allocation3], 0
    %8 = vsyncpa [#allocation6], 0
    %9 = vsyncpa [#allocation4], 0
    // Predicated region
    $region2: #{tpu_custom_call.1} parent=1 // pred_check
      _
    $region3: #{tpu_custom_call.1} parent=1 // pred_check_branch
      %11 = sbr.rel (0) target = $region5
    $region4: #{tpu_custom_call.1} parent=1 // pred_region
      %13 = vsyncadd [#allocation3], 0
      %s14 = sshll.u32 %s0, 4
      %s15 = int_to_ptr.hbm [resolvable:$true] %s14
      %s16 = sshll.u32 [#allocation2], 4
      %s17 = int_to_ptr.vmem [resolvable:$true] %s16
      %22 = dma.hbm_to_vmem [thread:$0]  %s15, 256, %s17, [#allocation3], 128, 128, 8
    $region5: #{tpu_custom_call.1} parent=1 // pred_fallthru
      _
    // Predicated region
    $region6: #{tpu_custom_call.1} parent=1 // pred_check
      _
    $region7: #{tpu_custom_call.1} parent=1 // pred_check_branch
      %24 = sbr.rel (0) target = $region9
    $region8: #{tpu_custom_call.1} parent=1 // pred_region
      %26 = vsyncadd [#allocation6], 0
      %s27 = sshll.u32 %s1, 4
      %s28 = int_to_ptr.hbm [resolvable:$true] %s27
      %s29 = sshll.u32 [#allocation5], 4
      %s30 = int_to_ptr.vmem [resolvable:$true] %s29
      %35 = dma.hbm_to_vmem [thread:$0]  %s28, 512, %s30, [#allocation6], 128, 128, 8
    $region9: #{tpu_custom_call.1} parent=1 // pred_fallthru
      _
    // Predicated region
    $region10: #{tpu_custom_call.1} parent=1 // pred_check
      _
    $region11: #{tpu_custom_call.1} parent=1 // pred_check_branch
      %37 = sbr.rel (0) target = $region13
    $region12: #{tpu_custom_call.1} parent=1 // pred_region
      %39 = dma.done [#allocation3], 256
    $region13: #{tpu_custom_call.1} parent=1 // pred_fallthru
      _
    // Predicated region
    $region14: #{tpu_custom_call.1} parent=1 // pred_check
      _
    $region15: #{tpu_custom_call.1} parent=1 // pred_check_branch
      %41 = sbr.rel (0) target = $region17
    $region16: #{tpu_custom_call.1} parent=1 // pred_region
      %43 = dma.done [#allocation6], 512
    $region17: #{tpu_custom_call.1} parent=1 // pred_fallthru
      _
    %v44 = vld [vmem:[#allocation2] sm:$0xff]
    %v45 = vld [vmem:[#allocation2 + $0x8] sm:$0xff]
    %v46 = vld [vmem:[#allocation5] sm:$0xff]
    %v47 = vld [vmem:[#allocation5 + $0x8] sm:$0xff]
    %v48 = vld [vmem:[#allocation5 + $0x10] sm:$0xff]
    %v49 = vld [vmem:[#allocation5 + $0x18] sm:$0xff]
    %vm50 = vcmask 261120
    %v52 = vsel %vm50, %v44, 0
    %v55 = vsel %vm50, %v45, 0
    %57 = vmatpush.msra.mxu0 0.0
    %58 = vmatpush.msra.mxu0 0.0
    %59 = vmatpush.msra.mxu0 0.0
    %60 = vmatpush.msra.mxu0 0.0
    %61 = vmatpush.msra.mxu0 0.0
    %62 = vmatpush.msra.mxu0 0.0
    %63 = vmatpush.msra.mxu0 0.0
    %64 = vmatpush.msra.mxu0 0.0
    %65 = vmatpush.msra.mxu0 0.0
    %66 = vmatpush.msra.mxu0 0.0
    %67 = vmatpush.msra.mxu0 0.0
    %68 = vmatpush.msra.mxu0 0.0
    %69 = vmatpush.msra.mxu0 %v49
    %70 = vmatpush.msra.mxu0 %v48
    %71 = vmatpush.msra.mxu0 %v47
    %72 = vmatpush.msra.mxu0 %v46
    %73 = vmatmul.f32.gmra.mxu0 %v52
    %v74 = vpop.f32.mrf.mxu0
    %v75 = vadd.f32 0.0, %v74
    %76 = vmatmul.f32.gmra.mxu0 %v55
    %v77 = vpop.f32.mrf.mxu0
    %v78 = vadd.f32 0.0, %v77
    %79 = vdwg.mxu0
    %v80 = vmul.f32 %v75, 0.17677669
    %v81 = vmul.f32 %v78, 0.17677669
    %84 = vrot.lane.b32.xlu0 %v80, 120
    %v85 = vpop.permute.xlu0 %84
    %86 = vrot.lane.b32.xlu0 %v81, 120
    %v87 = vpop.permute.xlu0 %86
    %88 = vrot.lane.b32.xlu0 %v80, 112
    %v89 = vpop.permute.xlu0 %88
    %90 = vrot.lane.b32.xlu0 %v81, 112
    %v91 = vpop.permute.xlu0 %90
    %92 = vrot.lane.b32.xlu0 %v80, 104
    %v93 = vpop.permute.xlu0 %92
    %94 = vrot.lane.b32.xlu0 %v81, 104
    %v95 = vpop.permute.xlu0 %94
    %98 = vrot.lane.b32.xlu0 %v75, 120
    %v99 = vpop.permute.xlu0 %98
    %100 = vrot.lane.b32.xlu0 %v78, 120
    %v101 = vpop.permute.xlu0 %100
    %102 = vrot.lane.b32.xlu0 %v75, 112
    %v103 = vpop.permute.xlu0 %102
    %104 = vrot.lane.b32.xlu0 %v78, 112
    %v105 = vpop.permute.xlu0 %104
    %106 = vrot.lane.b32.xlu0 %v75, 104
    %v107 = vpop.permute.xlu0 %106
    %108 = vrot.lane.b32.xlu0 %v78, 104
    %v109 = vpop.permute.xlu0 %108
    %110 = vrot.lane.b32.xlu0 %v75, 96
    %v111 = vpop.permute.xlu0 %110
    %vm112 = vcmask 64512
    %v113 = vsel %vm112, %v80, 0
    %v115 = vsel %vm112, %v111, 0
    %117 = vmatpush.xpose.msra.mxu0 0.0
    %118 = vmatpush.xpose.msra.mxu0 0.0
    %119 = vmatpush.xpose.msra.mxu0 0.0
    %120 = vmatpush.xpose.msra.mxu0 0.0
    %121 = vmatpush.xpose.msra.mxu0 0.0
    %122 = vmatpush.xpose.msra.mxu0 0.0
    %123 = vmatpush.xpose.msra.mxu0 0.0
    %124 = vmatpush.xpose.msra.mxu0 0.0
    %125 = vmatpush.xpose.msra.mxu0 0.0
    %126 = vmatpush.xpose.msra.mxu0 0.0
    %127 = vmatpush.xpose.msra.mxu0 0.0
    %128 = vmatpush.xpose.msra.mxu0 0.0
    %129 = vmatpush.xpose.msra.mxu0 0.0
    %130 = vmatpush.xpose.msra.mxu0 0.0
    %131 = vmatpush.xpose.msra.mxu0 0.0
    %132 = vmatpush.xpose.msra.mxu0 %v115
    %133 = vmatmul.f32.gmra.mxu0 %v113
    %v134 = vpop.f32.mrf.mxu0
    %v135 = vadd.f32 0.0, %v134
    %136 = vdwg.mxu0
    %137 = vrot.lane.b32.xlu0 %v78, 96
    %v138 = vpop.permute.xlu0 %137
    %v139 = vsel %vm112, %v81, 0
    %v141 = vsel %vm112, %v138, 0
    %143 = vmatpush.xpose.msra.mxu0 0.0
    %144 = vmatpush.xpose.msra.mxu0 0.0
    %145 = vmatpush.xpose.msra.mxu0 0.0
    %146 = vmatpush.xpose.msra.mxu0 0.0
    %147 = vmatpush.xpose.msra.mxu0 0.0
    %148 = vmatpush.xpose.msra.mxu0 0.0
    %149 = vmatpush.xpose.msra.mxu0 0.0
    %150 = vmatpush.xpose.msra.mxu0 0.0
    %151 = vmatpush.xpose.msra.mxu0 0.0
    %152 = vmatpush.xpose.msra.mxu0 0.0
    %153 = vmatpush.xpose.msra.mxu0 0.0
    %154 = vmatpush.xpose.msra.mxu0 0.0
    %155 = vmatpush.xpose.msra.mxu0 0.0
    %156 = vmatpush.xpose.msra.mxu0 0.0
    %157 = vmatpush.xpose.msra.mxu0 0.0
    %158 = vmatpush.xpose.msra.mxu0 %v141
    %159 = vmatmul.f32.gmra.mxu0 %v139
    %v160 = vpop.f32.mrf.mxu0
    %v161 = vadd.f32 0.0, %v160
    %162 = vdwg.mxu0
    %163 = vrot.lane.b32.xlu0 %v99, 96
    %v164 = vpop.permute.xlu0 %163
    %v165 = vsel %vm112, %v85, 0
    %v167 = vsel %vm112, %v164, 0
    %169 = vmatpush.xpose.msra.mxu0 0.0
    %170 = vmatpush.xpose.msra.mxu0 0.0
    %171 = vmatpush.xpose.msra.mxu0 0.0
    %172 = vmatpush.xpose.msra.mxu0 0.0
    %173 = vmatpush.xpose.msra.mxu0 0.0
    %174 = vmatpush.xpose.msra.mxu0 0.0
    %175 = vmatpush.xpose.msra.mxu0 0.0
    %176 = vmatpush.xpose.msra.mxu0 0.0
    %177 = vmatpush.xpose.msra.mxu0 0.0
    %178 = vmatpush.xpose.msra.mxu0 0.0
    %179 = vmatpush.xpose.msra.mxu0 0.0
    %180 = vmatpush.xpose.msra.mxu0 0.0
    %181 = vmatpush.xpose.msra.mxu0 0.0
    %182 = vmatpush.xpose.msra.mxu0 0.0
    %183 = vmatpush.xpose.msra.mxu0 0.0
    %184 = vmatpush.xpose.msra.mxu0 %v167
    %185 = vmatmul.f32.gmra.mxu0 %v165
    %v186 = vpop.f32.mrf.mxu0
    %v187 = vadd.f32 0.0, %v186
    %188 = vdwg.mxu0
    %189 = vrot.lane.b32.xlu0 %v101, 96
    %v190 = vpop.permute.xlu0 %189
    %v191 = vsel %vm112, %v87, 0
    %v193 = vsel %vm112, %v190, 0
    %195 = vmatpush.xpose.msra.mxu0 0.0
    %196 = vmatpush.xpose.msra.mxu0 0.0
    %197 = vmatpush.xpose.msra.mxu0 0.0
    %198 = vmatpush.xpose.msra.mxu0 0.0
    %199 = vmatpush.xpose.msra.mxu0 0.0
    %200 = vmatpush.xpose.msra.mxu0 0.0
    %201 = vmatpush.xpose.msra.mxu0 0.0
    %202 = vmatpush.xpose.msra.mxu0 0.0
    %203 = vmatpush.xpose.msra.mxu0 0.0
    %204 = vmatpush.xpose.msra.mxu0 0.0
    %205 = vmatpush.xpose.msra.mxu0 0.0
    %206 = vmatpush.xpose.msra.mxu0 0.0
    %207 = vmatpush.xpose.msra.mxu0 0.0
    %208 = vmatpush.xpose.msra.mxu0 0.0
    %209 = vmatpush.xpose.msra.mxu0 0.0
    %210 = vmatpush.xpose.msra.mxu0 %v193
    %211 = vmatmul.f32.gmra.mxu0 %v191
    %v212 = vpop.f32.mrf.mxu0
    %v213 = vadd.f32 0.0, %v212
    %214 = vdwg.mxu0
    %215 = vrot.lane.b32.xlu0 %v103, 96
    %v216 = vpop.permute.xlu0 %215
    %v217 = vsel %vm112, %v89, 0
    %v219 = vsel %vm112, %v216, 0
    %221 = vmatpush.xpose.msra.mxu0 0.0
    %222 = vmatpush.xpose.msra.mxu0 0.0
    %223 = vmatpush.xpose.msra.mxu0 0.0
    %224 = vmatpush.xpose.msra.mxu0 0.0
    %225 = vmatpush.xpose.msra.mxu0 0.0
    %226 = vmatpush.xpose.msra.mxu0 0.0
    %227 = vmatpush.xpose.msra.mxu0 0.0
    %228 = vmatpush.xpose.msra.mxu0 0.0
    %229 = vmatpush.xpose.msra.mxu0 0.0
    %230 = vmatpush.xpose.msra.mxu0 0.0
    %231 = vmatpush.xpose.msra.mxu0 0.0
    %232 = vmatpush.xpose.msra.mxu0 0.0
    %233 = vmatpush.xpose.msra.mxu0 0.0
    %234 = vmatpush.xpose.msra.mxu0 0.0
    %235 = vmatpush.xpose.msra.mxu0 0.0
    %236 = vmatpush.xpose.msra.mxu0 %v219
    %237 = vmatmul.f32.gmra.mxu0 %v217
    %v238 = vpop.f32.mrf.mxu0
    %v239 = vadd.f32 0.0, %v238
    %240 = vdwg.mxu0
    %241 = vrot.lane.b32.xlu0 %v105, 96
    %v242 = vpop.permute.xlu0 %241
    %v243 = vsel %vm112, %v91, 0
    %v245 = vsel %vm112, %v242, 0
    %247 = vmatpush.xpose.msra.mxu0 0.0
    %248 = vmatpush.xpose.msra.mxu0 0.0
    %249 = vmatpush.xpose.msra.mxu0 0.0
    %250 = vmatpush.xpose.msra.mxu0 0.0
    %251 = vmatpush.xpose.msra.mxu0 0.0
    %252 = vmatpush.xpose.msra.mxu0 0.0
    %253 = vmatpush.xpose.msra.mxu0 0.0
    %254 = vmatpush.xpose.msra.mxu0 0.0
    %255 = vmatpush.xpose.msra.mxu0 0.0
    %256 = vmatpush.xpose.msra.mxu0 0.0
    %257 = vmatpush.xpose.msra.mxu0 0.0
    %258 = vmatpush.xpose.msra.mxu0 0.0
    %259 = vmatpush.xpose.msra.mxu0 0.0
    %260 = vmatpush.xpose.msra.mxu0 0.0
    %261 = vmatpush.xpose.msra.mxu0 0.0
    %262 = vmatpush.xpose.msra.mxu0 %v245
    %263 = vmatmul.f32.gmra.mxu0 %v243
    %v264 = vpop.f32.mrf.mxu0
    %v265 = vadd.f32 0.0, %v264
    %266 = vdwg.mxu0
    %267 = vrot.lane.b32.xlu0 %v107, 96
    %v268 = vpop.permute.xlu0 %267
    %v269 = vsel %vm112, %v93, 0
    %v271 = vsel %vm112, %v268, 0
    %273 = vmatpush.xpose.msra.mxu0 0.0
    %274 = vmatpush.xpose.msra.mxu0 0.0
    %275 = vmatpush.xpose.msra.mxu0 0.0
    %276 = vmatpush.xpose.msra.mxu0 0.0
    %277 = vmatpush.xpose.msra.mxu0 0.0
    %278 = vmatpush.xpose.msra.mxu0 0.0
    %279 = vmatpush.xpose.msra.mxu0 0.0
    %280 = vmatpush.xpose.msra.mxu0 0.0
    %281 = vmatpush.xpose.msra.mxu0 0.0
    %282 = vmatpush.xpose.msra.mxu0 0.0
    %283 = vmatpush.xpose.msra.mxu0 0.0
    %284 = vmatpush.xpose.msra.mxu0 0.0
    %285 = vmatpush.xpose.msra.mxu0 0.0
    %286 = vmatpush.xpose.msra.mxu0 0.0
    %287 = vmatpush.xpose.msra.mxu0 0.0
    %288 = vmatpush.xpose.msra.mxu0 %v271
    %289 = vmatmul.f32.gmra.mxu0 %v269
    %v290 = vpop.f32.mrf.mxu0
    %v291 = vadd.f32 0.0, %v290
    %292 = vdwg.mxu0
    %293 = vrot.lane.b32.xlu0 %v109, 96
    %v294 = vpop.permute.xlu0 %293
    %v295 = vsel %vm112, %v95, 0
    %v297 = vsel %vm112, %v294, 0
    %299 = vmatpush.xpose.msra.mxu0 0.0
    %300 = vmatpush.xpose.msra.mxu0 0.0
    %301 = vmatpush.xpose.msra.mxu0 0.0
    %302 = vmatpush.xpose.msra.mxu0 0.0
    %303 = vmatpush.xpose.msra.mxu0 0.0
    %304 = vmatpush.xpose.msra.mxu0 0.0
    %305 = vmatpush.xpose.msra.mxu0 0.0
    %306 = vmatpush.xpose.msra.mxu0 0.0
    %307 = vmatpush.xpose.msra.mxu0 0.0
    %308 = vmatpush.xpose.msra.mxu0 0.0
    %309 = vmatpush.xpose.msra.mxu0 0.0
    %310 = vmatpush.xpose.msra.mxu0 0.0
    %311 = vmatpush.xpose.msra.mxu0 0.0
    %312 = vmatpush.xpose.msra.mxu0 0.0
    %313 = vmatpush.xpose.msra.mxu0 0.0
    %314 = vmatpush.xpose.msra.mxu0 %v297
    %315 = vmatmul.f32.gmra.mxu0 %v295
    %v316 = vpop.f32.mrf.mxu0
    %v317 = vadd.f32 0.0, %v316
    %318 = vdwg.mxu0
    %v319 = vlaneseq
    %v320 = vshrl.u32 %v319, 7
    %v321 = vlaneseq
    %v322 = vand.u32 %v321, 127
    %vm323 = vcmp.ge.s32.totalorder %v320, %v322
    %v324 = vsel %vm323, %v135, -inf
    %v325 = vsel %vm323, %v161, -inf
    %v326 = vsel %vm323, %v187, -inf
    %v327 = vsel %vm323, %v213, -inf
    %v328 = vsel %vm323, %v239, -inf
    %v329 = vsel %vm323, %v265, -inf
    %v330 = vsel %vm323, %v291, -inf
    %v331 = vsel %vm323, %v317, -inf
    %v332 = vsel %vm112, %v324, -inf
    %333 = vmax.xlane.f32.xlu0 %v332
    %v334 = vpop.xlane.xlu0 %333
    %v335 = vsel %vm112, %v325, -inf
    %336 = vmax.xlane.f32.xlu0 %v335
    %v337 = vpop.xlane.xlu0 %336
    %v338 = vsel %vm112, %v326, -inf
    %339 = vmax.xlane.f32.xlu0 %v338
    %v340 = vpop.xlane.xlu0 %339
    %v341 = vsel %vm112, %v327, -inf
    %342 = vmax.xlane.f32.xlu0 %v341
    %v343 = vpop.xlane.xlu0 %342
    %v344 = vsel %vm112, %v328, -inf
    %345 = vmax.xlane.f32.xlu0 %v344
    %v346 = vpop.xlane.xlu0 %345
    %v347 = vsel %vm112, %v329, -inf
    %348 = vmax.xlane.f32.xlu0 %v347
    %v349 = vpop.xlane.xlu0 %348
    %v350 = vsel %vm112, %v330, -inf
    %351 = vmax.xlane.f32.xlu0 %v350
    %v352 = vpop.xlane.xlu0 %351
    %v353 = vsel %vm112, %v331, -inf
    %354 = vmax.xlane.f32.xlu0 %v353
    %v355 = vpop.xlane.xlu0 %354
    %v356 = vsub.f32 %v324, %v334
    %v357 = vsub.f32 %v325, %v337
    %v358 = vsub.f32 %v326, %v340
    %v359 = vsub.f32 %v327, %v343
    %v360 = vsub.f32 %v328, %v346
    %v361 = vsub.f32 %v329, %v349
    %v362 = vsub.f32 %v330, %v352
    %v363 = vsub.f32 %v331, %v355
    %v364 = vmul.f32 %v356, 1.442695
    %v365 = vpow.pop %v364
    %v366 = vmul.f32 %v357, 1.442695
    %v367 = vpow.pop %v366
    %v368 = vmul.f32 %v358, 1.442695
    %v369 = vpow.pop %v368
    %v370 = vmul.f32 %v359, 1.442695
    %v371 = vpow.pop %v370
    %v372 = vmul.f32 %v360, 1.442695
    %v373 = vpow.pop %v372
    %v374 = vmul.f32 %v361, 1.442695
    %v375 = vpow.pop %v374
    %v376 = vmul.f32 %v362, 1.442695
    %v377 = vpow.pop %v376
    %v378 = vmul.f32 %v363, 1.442695
    %v379 = vpow.pop %v378
    %v380 = vsel %vm112, %v365, 0.0
    %381 = vadd.xlane.f32.xlu0 %v380
    %v382 = vpop.xlane.xlu0 %381
    %v383 = vsel %vm112, %v367, 0.0
    %384 = vadd.xlane.f32.xlu0 %v383
    %v385 = vpop.xlane.xlu0 %384
    %v386 = vsel %vm112, %v369, 0.0
    %387 = vadd.xlane.f32.xlu0 %v386
    %v388 = vpop.xlane.xlu0 %387
    %v389 = vsel %vm112, %v371, 0.0
    %390 = vadd.xlane.f32.xlu0 %v389
    %v391 = vpop.xlane.xlu0 %390
    %v392 = vsel %vm112, %v373, 0.0
    %393 = vadd.xlane.f32.xlu0 %v392
    %v394 = vpop.xlane.xlu0 %393
    %v395 = vsel %vm112, %v375, 0.0
    %396 = vadd.xlane.f32.xlu0 %v395
    %v397 = vpop.xlane.xlu0 %396
    %v398 = vsel %vm112, %v377, 0.0
    %399 = vadd.xlane.f32.xlu0 %v398
    %v400 = vpop.xlane.xlu0 %399
    %v401 = vsel %vm112, %v379, 0.0
    %402 = vadd.xlane.f32.xlu0 %v401
    %v403 = vpop.xlane.xlu0 %402
    %v404 = vrcp.pop %v382
    %v405 = vmul.f32 %v382, %v404
    %v406 = vsub.f32 1.0, %v405
    %v407 = vmul.f32 %v404, %v406
    %v408 = vadd.f32 %v404, %v407
    %vm409 = vweird.f32 %v382
    %vm410 = vweird.f32 %v404
    %vm411 = vmor %vm409, %vm410
    %v412 = vsel %vm411, %v404, %v408
    %v413 = vand.u32 2147483647, %v382
    %vm414 = vcmp.eq.f32.partialorder %v413, 8.507059e+37
    %v415 = vand.u32 %v382, 2147483648
    %v416 = vor.u32 1.1754944e-38, %v415
    %v417 = vsel %vm414, %v416, %v412
    %v418 = vrcp.pop %v385
    %v419 = vmul.f32 %v385, %v418
    %v420 = vsub.f32 1.0, %v419
    %v421 = vmul.f32 %v418, %v420
    %v422 = vadd.f32 %v418, %v421
    %vm423 = vweird.f32 %v385
    %vm424 = vweird.f32 %v418
    %vm425 = vmor %vm423, %vm424
    %v426 = vsel %vm425, %v418, %v422
    %v427 = vand.u32 2147483647, %v385
    %vm428 = vcmp.eq.f32.partialorder %v427, 8.507059e+37
    %v429 = vand.u32 %v385, 2147483648
    %v430 = vor.u32 1.1754944e-38, %v429
    %v431 = vsel %vm428, %v430, %v426
    %v432 = vrcp.pop %v388
    %v433 = vmul.f32 %v388, %v432
    %v434 = vsub.f32 1.0, %v433
    %v435 = vmul.f32 %v432, %v434
    %v436 = vadd.f32 %v432, %v435
    %vm437 = vweird.f32 %v388
    %vm438 = vweird.f32 %v432
    %vm439 = vmor %vm437, %vm438
    %v440 = vsel %vm439, %v432, %v436
    %v441 = vand.u32 2147483647, %v388
    %vm442 = vcmp.eq.f32.partialorder %v441, 8.507059e+37
    %v443 = vand.u32 %v388, 2147483648
    %v444 = vor.u32 1.1754944e-38, %v443
    %v445 = vsel %vm442, %v444, %v440
    %v446 = vrcp.pop %v391
    %v447 = vmul.f32 %v391, %v446
    %v448 = vsub.f32 1.0, %v447
    %v449 = vmul.f32 %v446, %v448
    %v450 = vadd.f32 %v446, %v449
    %vm451 = vweird.f32 %v391
    %vm452 = vweird.f32 %v446
    %vm453 = vmor %vm451, %vm452
    %v454 = vsel %vm453, %v446, %v450
    %v455 = vand.u32 2147483647, %v391
    %vm456 = vcmp.eq.f32.partialorder %v455, 8.507059e+37
    %v457 = vand.u32 %v391, 2147483648
    %v458 = vor.u32 1.1754944e-38, %v457
    %v459 = vsel %vm456, %v458, %v454
    %v460 = vrcp.pop %v394
    %v461 = vmul.f32 %v394, %v460
    %v462 = vsub.f32 1.0, %v461
    %v463 = vmul.f32 %v460, %v462
    %v464 = vadd.f32 %v460, %v463
    %vm465 = vweird.f32 %v394
    %vm466 = vweird.f32 %v460
    %vm467 = vmor %vm465, %vm466
    %v468 = vsel %vm467, %v460, %v464
    %v469 = vand.u32 2147483647, %v394
    %vm470 = vcmp.eq.f32.partialorder %v469, 8.507059e+37
    %v471 = vand.u32 %v394, 2147483648
    %v472 = vor.u32 1.1754944e-38, %v471
    %v473 = vsel %vm470, %v472, %v468
    %v474 = vrcp.pop %v397
    %v475 = vmul.f32 %v397, %v474
    %v476 = vsub.f32 1.0, %v475
    %v477 = vmul.f32 %v474, %v476
    %v478 = vadd.f32 %v474, %v477
    %vm479 = vweird.f32 %v397
    %vm480 = vweird.f32 %v474
    %vm481 = vmor %vm479, %vm480
    %v482 = vsel %vm481, %v474, %v478
    %v483 = vand.u32 2147483647, %v397
    %vm484 = vcmp.eq.f32.partialorder %v483, 8.507059e+37
    %v485 = vand.u32 %v397, 2147483648
    %v486 = vor.u32 1.1754944e-38, %v485
    %v487 = vsel %vm484, %v486, %v482
    %v488 = vrcp.pop %v400
    %v489 = vmul.f32 %v400, %v488
    %v490 = vsub.f32 1.0, %v489
    %v491 = vmul.f32 %v488, %v490
    %v492 = vadd.f32 %v488, %v491
    %vm493 = vweird.f32 %v400
    %vm494 = vweird.f32 %v488
    %vm495 = vmor %vm493, %vm494
    %v496 = vsel %vm495, %v488, %v492
    %v497 = vand.u32 2147483647, %v400
    %vm498 = vcmp.eq.f32.partialorder %v497, 8.507059e+37
    %v499 = vand.u32 %v400, 2147483648
    %v500 = vor.u32 1.1754944e-38, %v499
    %v501 = vsel %vm498, %v500, %v496
    %v502 = vrcp.pop %v403
    %v503 = vmul.f32 %v403, %v502
    %v504 = vsub.f32 1.0, %v503
    %v505 = vmul.f32 %v502, %v504
    %v506 = vadd.f32 %v502, %v505
    %vm507 = vweird.f32 %v403
    %vm508 = vweird.f32 %v502
    %vm509 = vmor %vm507, %vm508
    %v510 = vsel %vm509, %v502, %v506
    %v511 = vand.u32 2147483647, %v403
    %vm512 = vcmp.eq.f32.partialorder %v511, 8.507059e+37
    %v513 = vand.u32 %v403, 2147483648
    %v514 = vor.u32 1.1754944e-38, %v513
    %v515 = vsel %vm512, %v514, %v510
    %516 = vrot.lane.b32.xlu0 %v75, 64
    %v517 = vpop.permute.xlu0 %516
    %v520 = vsel %vm112, %v365, 0
    %522 = vmatpush.msra.mxu0 0.0
    %523 = vmatpush.msra.mxu0 0.0
    %524 = vmatpush.msra.mxu0 0.0
    %525 = vmatpush.msra.mxu0 0.0
    %526 = vmatpush.msra.mxu0 0.0
    %527 = vmatpush.msra.mxu0 0.0
    %528 = vmatpush.msra.mxu0 0.0
    %529 = vmatpush.msra.mxu0 0.0
    %530 = vmatpush.msra.mxu0 0.0
    %531 = vmatpush.msra.mxu0 0.0
    %532 = vmatpush.msra.mxu0 0.0
    %533 = vmatpush.msra.mxu0 0.0
    %534 = vmatpush.msra.mxu0 0.0
    %535 = vmatpush.msra.mxu0 0.0
    %536 = vmatpush.msra.mxu0 0.0
    %537 = vmatpush.msra.mxu0 %v517
    %538 = vmatmul.f32.gmra.mxu0 %v520
    %v539 = vpop.f32.mrf.mxu0
    %v540 = vadd.f32 0.0, %v539
    %541 = vdwg.mxu0
    %542 = vrot.lane.b32.xlu0 %v78, 64
    %v543 = vpop.permute.xlu0 %542
    %v546 = vsel %vm112, %v367, 0
    %548 = vmatpush.msra.mxu0 0.0
    %549 = vmatpush.msra.mxu0 0.0
    %550 = vmatpush.msra.mxu0 0.0
    %551 = vmatpush.msra.mxu0 0.0
    %552 = vmatpush.msra.mxu0 0.0
    %553 = vmatpush.msra.mxu0 0.0
    %554 = vmatpush.msra.mxu0 0.0
    %555 = vmatpush.msra.mxu0 0.0
    %556 = vmatpush.msra.mxu0 0.0
    %557 = vmatpush.msra.mxu0 0.0
    %558 = vmatpush.msra.mxu0 0.0
    %559 = vmatpush.msra.mxu0 0.0
    %560 = vmatpush.msra.mxu0 0.0
    %561 = vmatpush.msra.mxu0 0.0
    %562 = vmatpush.msra.mxu0 0.0
    %563 = vmatpush.msra.mxu0 %v543
    %564 = vmatmul.f32.gmra.mxu0 %v546
    %v565 = vpop.f32.mrf.mxu0
    %v566 = vadd.f32 0.0, %v565
    %567 = vdwg.mxu0
    %568 = vrot.lane.b32.xlu0 %v99, 64
    %v569 = vpop.permute.xlu0 %568
    %v572 = vsel %vm112, %v369, 0
    %574 = vmatpush.msra.mxu0 0.0
    %575 = vmatpush.msra.mxu0 0.0
    %576 = vmatpush.msra.mxu0 0.0
    %577 = vmatpush.msra.mxu0 0.0
    %578 = vmatpush.msra.mxu0 0.0
    %579 = vmatpush.msra.mxu0 0.0
    %580 = vmatpush.msra.mxu0 0.0
    %581 = vmatpush.msra.mxu0 0.0
    %582 = vmatpush.msra.mxu0 0.0
    %583 = vmatpush.msra.mxu0 0.0
    %584 = vmatpush.msra.mxu0 0.0
    %585 = vmatpush.msra.mxu0 0.0
    %586 = vmatpush.msra.mxu0 0.0
    %587 = vmatpush.msra.mxu0 0.0
    %588 = vmatpush.msra.mxu0 0.0
    %589 = vmatpush.msra.mxu0 %v569
    %590 = vmatmul.f32.gmra.mxu0 %v572
    %v591 = vpop.f32.mrf.mxu0
    %v592 = vadd.f32 0.0, %v591
    %593 = vdwg.mxu0
    %594 = vrot.lane.b32.xlu0 %v101, 64
    %v595 = vpop.permute.xlu0 %594
    %v598 = vsel %vm112, %v371, 0
    %600 = vmatpush.msra.mxu0 0.0
    %601 = vmatpush.msra.mxu0 0.0
    %602 = vmatpush.msra.mxu0 0.0
    %603 = vmatpush.msra.mxu0 0.0
    %604 = vmatpush.msra.mxu0 0.0
    %605 = vmatpush.msra.mxu0 0.0
    %606 = vmatpush.msra.mxu0 0.0
    %607 = vmatpush.msra.mxu0 0.0
    %608 = vmatpush.msra.mxu0 0.0
    %609 = vmatpush.msra.mxu0 0.0
    %610 = vmatpush.msra.mxu0 0.0
    %611 = vmatpush.msra.mxu0 0.0
    %612 = vmatpush.msra.mxu0 0.0
    %613 = vmatpush.msra.mxu0 0.0
    %614 = vmatpush.msra.mxu0 0.0
    %615 = vmatpush.msra.mxu0 %v595
    %616 = vmatmul.f32.gmra.mxu0 %v598
    %v617 = vpop.f32.mrf.mxu0
    %v618 = vadd.f32 0.0, %v617
    %619 = vdwg.mxu0
    %620 = vrot.lane.b32.xlu0 %v103, 64
    %v621 = vpop.permute.xlu0 %620
    %v624 = vsel %vm112, %v373, 0
    %626 = vmatpush.msra.mxu0 0.0
    %627 = vmatpush.msra.mxu0 0.0
    %628 = vmatpush.msra.mxu0 0.0
    %629 = vmatpush.msra.mxu0 0.0
    %630 = vmatpush.msra.mxu0 0.0
    %631 = vmatpush.msra.mxu0 0.0
    %632 = vmatpush.msra.mxu0 0.0
    %633 = vmatpush.msra.mxu0 0.0
    %634 = vmatpush.msra.mxu0 0.0
    %635 = vmatpush.msra.mxu0 0.0
    %636 = vmatpush.msra.mxu0 0.0
    %637 = vmatpush.msra.mxu0 0.0
    %638 = vmatpush.msra.mxu0 0.0
    %639 = vmatpush.msra.mxu0 0.0
    %640 = vmatpush.msra.mxu0 0.0
    %641 = vmatpush.msra.mxu0 %v621
    %642 = vmatmul.f32.gmra.mxu0 %v624
    %v643 = vpop.f32.mrf.mxu0
    %v644 = vadd.f32 0.0, %v643
    %645 = vdwg.mxu0
    %646 = vrot.lane.b32.xlu0 %v105, 64
    %v647 = vpop.permute.xlu0 %646
    %v650 = vsel %vm112, %v375, 0
    %652 = vmatpush.msra.mxu0 0.0
    %653 = vmatpush.msra.mxu0 0.0
    %654 = vmatpush.msra.mxu0 0.0
    %655 = vmatpush.msra.mxu0 0.0
    %656 = vmatpush.msra.mxu0 0.0
    %657 = vmatpush.msra.mxu0 0.0
    %658 = vmatpush.msra.mxu0 0.0
    %659 = vmatpush.msra.mxu0 0.0
    %660 = vmatpush.msra.mxu0 0.0
    %661 = vmatpush.msra.mxu0 0.0
    %662 = vmatpush.msra.mxu0 0.0
    %663 = vmatpush.msra.mxu0 0.0
    %664 = vmatpush.msra.mxu0 0.0
    %665 = vmatpush.msra.mxu0 0.0
    %666 = vmatpush.msra.mxu0 0.0
    %667 = vmatpush.msra.mxu0 %v647
    %668 = vmatmul.f32.gmra.mxu0 %v650
    %v669 = vpop.f32.mrf.mxu0
    %v670 = vadd.f32 0.0, %v669
    %671 = vdwg.mxu0
    %672 = vrot.lane.b32.xlu0 %v107, 64
    %v673 = vpop.permute.xlu0 %672
    %v676 = vsel %vm112, %v377, 0
    %678 = vmatpush.msra.mxu0 0.0
    %679 = vmatpush.msra.mxu0 0.0
    %680 = vmatpush.msra.mxu0 0.0
    %681 = vmatpush.msra.mxu0 0.0
    %682 = vmatpush.msra.mxu0 0.0
    %683 = vmatpush.msra.mxu0 0.0
    %684 = vmatpush.msra.mxu0 0.0
    %685 = vmatpush.msra.mxu0 0.0
    %686 = vmatpush.msra.mxu0 0.0
    %687 = vmatpush.msra.mxu0 0.0
    %688 = vmatpush.msra.mxu0 0.0
    %689 = vmatpush.msra.mxu0 0.0
    %690 = vmatpush.msra.mxu0 0.0
    %691 = vmatpush.msra.mxu0 0.0
    %692 = vmatpush.msra.mxu0 0.0
    %693 = vmatpush.msra.mxu0 %v673
    %694 = vmatmul.f32.gmra.mxu0 %v676
    %v695 = vpop.f32.mrf.mxu0
    %v696 = vadd.f32 0.0, %v695
    %697 = vdwg.mxu0
    %698 = vrot.lane.b32.xlu0 %v109, 64
    %v699 = vpop.permute.xlu0 %698
    %v702 = vsel %vm112, %v379, 0
    %704 = vmatpush.msra.mxu0 0.0
    %705 = vmatpush.msra.mxu0 0.0
    %706 = vmatpush.msra.mxu0 0.0
    %707 = vmatpush.msra.mxu0 0.0
    %708 = vmatpush.msra.mxu0 0.0
    %709 = vmatpush.msra.mxu0 0.0
    %710 = vmatpush.msra.mxu0 0.0
    %711 = vmatpush.msra.mxu0 0.0
    %712 = vmatpush.msra.mxu0 0.0
    %713 = vmatpush.msra.mxu0 0.0
    %714 = vmatpush.msra.mxu0 0.0
    %715 = vmatpush.msra.mxu0 0.0
    %716 = vmatpush.msra.mxu0 0.0
    %717 = vmatpush.msra.mxu0 0.0
    %718 = vmatpush.msra.mxu0 0.0
    %719 = vmatpush.msra.mxu0 %v699
    %720 = vmatmul.f32.gmra.mxu0 %v702
    %v721 = vpop.f32.mrf.mxu0
    %v722 = vadd.f32 0.0, %v721
    %723 = vdwg.mxu0
    %v724 = vmul.f32 %v540, %v417
    %v725 = vmul.f32 %v566, %v431
    %v726 = vmul.f32 %v592, %v445
    %v727 = vmul.f32 %v618, %v459
    %v728 = vmul.f32 %v644, %v473
    %v729 = vmul.f32 %v670, %v487
    %v730 = vmul.f32 %v696, %v501
    %v731 = vmul.f32 %v722, %v515
    %734 = vrot.lane.b32.xlu0 %v726, 8
    %v735 = vpop.permute.xlu0 %734
    %736 = vrot.lane.b32.xlu0 %v727, 8
    %v737 = vpop.permute.xlu0 %736
    %742 = vrot.lane.b32.xlu0 %v728, 16
    %v743 = vpop.permute.xlu0 %742
    %744 = vrot.lane.b32.xlu0 %v729, 16
    %v745 = vpop.permute.xlu0 %744
    %750 = vrot.lane.b32.xlu0 %v730, 24
    %v751 = vpop.permute.xlu0 %750
    %752 = vrot.lane.b32.xlu0 %v731, 24
    %v753 = vpop.permute.xlu0 %752
    %v756 = vsel %vm112, %v724, %v735
    %v757 = vsel %vm112, %v725, %v737
    %vm758 = vcmask 130048
    %v759 = vsel %vm758, %v756, %v743
    %v760 = vsel %vm758, %v757, %v745
    %vm761 = vcmask 195584
    %v762 = vsel %vm761, %v759, %v751
    %v763 = vsel %vm761, %v760, %v753
    %764 = vst.msk [vmem:[#allocation7] sm:$0xff] %vm50, %v762
    %765 = vst.msk [vmem:[#allocation7 + $0x8] sm:$0xff] %vm50, %v763
    // Predicated region
    $region18: #{tpu_custom_call.1} parent=1 // pred_check
      _
    $region19: #{tpu_custom_call.1} parent=1 // pred_check_branch
      %767 = sbr.rel (0) target = $region21
    $region20: #{tpu_custom_call.1} parent=1 // pred_region
      %769 = vsyncadd [#allocation4], 0
      %s770 = sshll.u32 [#allocation7], 4
      %s771 = int_to_ptr.vmem [resolvable:$true] %s770
      %s772 = sshll.u32 %s2, 4
      %s773 = int_to_ptr.hbm [resolvable:$true] %s772
      %778 = dma.vmem_to_hbm [thread:$0]  %s771, 256, %s773, [#allocation4], 128, 128, 8
    $region21: #{tpu_custom_call.1} parent=1 // pred_fallthru
      _
    // Predicated region
    $region22: #{tpu_custom_call.1} parent=1 // pred_check
      _
    $region23: #{tpu_custom_call.1} parent=1 // pred_check_branch
      %780 = sbr.rel (0) target = $region25
    $region24: #{tpu_custom_call.1} parent=1 // pred_region
      %782 = dma.done [#allocation4], 256
    $region25: #{tpu_custom_call.1} parent=1 // pred_fallthru
      _
    %783 = vsyncpa [#allocation3], 1
    %784 = vsyncpa [#allocation6], 1
    %785 = vsyncpa [#allocation4], 1

</llo_original>
